<compile_context>
chip_gen: v7x
topology: tpu7x:2x2x1
jax: 0.10.0
libtpu: 0.0.40
codegen_flags: <defaults>
</compile_context>

<pallas_src>
import functools

import jax
import jax.numpy as jnp
from jax.experimental import pallas as pl
from jax.experimental.pallas import tpu as pltpu


# ---------------------------------------------------------------------------
# Counter-based PRNG: "triple32" integer mixer (C. Wellons), written with
# signed-int32 wrapping arithmetic only.  Logical right shifts are emulated
# with arithmetic shift + mask so only plain i32 ops are emitted (safe for
# both Mosaic and interpret mode).
# ---------------------------------------------------------------------------
def _shr_logical(x, k):
    return jnp.bitwise_and(jnp.right_shift(x, k), jnp.int32((1 << (32 - k)) - 1))


def _mix32(x):
    x = x ^ _shr_logical(x, 17)
    x = x * jnp.int32(-312656709)     # 0xed5ad4bb
    x = x ^ _shr_logical(x, 11)
    x = x * jnp.int32(-1403970735)    # 0xac4c1b51
    x = x ^ _shr_logical(x, 15)
    x = x * jnp.int32(830864299)      # 0x31848bab
    x = x ^ _shr_logical(x, 14)
    return x                          # uniform over all 32-bit patterns


def _token_masking_kernel(seed_ref, x_ref, o_ref, *,
                          threshold_signed, mask_value, row_len):
    tb, s = x_ref.shape
    # Global element index for this tile (tile-size invariant randomness).
    row0 = pl.program_id(0) * tb
    rows = jax.lax.broadcasted_iota(jnp.int32, (tb, s), 0) + row0
    cols = jax.lax.broadcasted_iota(jnp.int32, (tb, s), 1)
    idx = rows * jnp.int32(row_len) + cols

    seed_mix = seed_ref[0] * jnp.int32(-1640531527)   # 0x9e3779b9 (golden ratio)
    bits = _mix32(idx ^ seed_mix)                     # uniform int32

    # uniform(0,1) < p  <=>  u32 bits < floor(p*2^32)
    #                   <=>  (signed-view bits) < floor(p*2^32) - 2^31
    keep = bits < jnp.int32(threshold_signed)
    o_ref[...] = jnp.where(keep, x_ref[...],
                           jnp.asarray(mask_value, dtype=x_ref.dtype))


def token_masking(x, seed, *, p: float = 0.1, mask_value=0, training: bool = True):
    """Pallas TPU implementation of TokenMasking.forward."""
    if (not training) or p <= 0.0:
        return x
    if p >= 1.0:
        # rand() < 1.0 is always true -> every token kept -> identity.
        return x

    B, S = x.shape
    threshold_u = min(int(p * 4294967296.0), 4294967295)
    threshold_signed = threshold_u - 2147483648       # signed view of u32 threshold

    # Row tiling: ~1 MiB lane-dense blocks (safe under v5e's 16 MiB scoped
    # default even with double buffering + the int32 temporaries; re-derivable
    # against v7x's 64 MiB VMEM).
    itemsize = jnp.dtype(x.dtype).itemsize
    bytes_per_row = S * itemsize
    target_block_bytes = 1 << 20                      # ~1 MiB per block
    if B * bytes_per_row <= target_block_bytes:
        tb = B                                        # whole array, one block
    else:
        tb = max(8, (target_block_bytes // bytes_per_row) // 8 * 8)
        tb = min(tb, B)
    grid = (pl.cdiv(B, tb),)

    kernel = functools.partial(
        _token_masking_kernel,
        threshold_signed=threshold_signed,
        mask_value=mask_value,
        row_len=S,
    )

    seed_arr = jnp.asarray(seed, dtype=jnp.int32).reshape((1,))

    return pl.pallas_call(
        kernel,
        out_shape=jax.ShapeDtypeStruct(x.shape, x.dtype),
        grid_spec=pltpu.PrefetchScalarGridSpec(
            num_scalar_prefetch=1,                    # seed lands in SMEM
            grid=grid,
            in_specs=[pl.BlockSpec((tb, S), lambda i, seed: (i, 0))],
            out_specs=pl.BlockSpec((tb, S), lambda i, seed: (i, 0)),
        ),
        compiler_params=pltpu.CompilerParams(
            dimension_semantics=("parallel",),        # megacore sharding on v7x
        ),
        cost_estimate=pl.CostEstimate(
            flops=12 * B * S,
            transcendentals=0,
            bytes_accessed=2 * B * S * itemsize + 4,
        ),
    )(seed_arr, x)


if __name__ == "__main__":
    key = jax.random.PRNGKey(0)
    p, mask_value = 0.1, 0

    # Small token-id batch (lane-aligned last dim), single block.
    B, S = 8, 128
    x = jax.random.randint(key, (B, S), minval=1, maxval=30000, dtype=jnp.int32)

    out = jax.block_until_ready(
        token_masking(x, seed=1234, p=p, mask_value=mask_value, training=True))

    # every output element is either the original token or mask_value
    assert bool(jnp.all((out == x) | (out == mask_value)))
    # fraction of kept tokens should be roughly p
    kept_frac = float(jnp.mean((out == x).astype(jnp.float32)))
    assert 0.0 < kept_frac < 0.5, f"kept fraction {kept_frac} not near p={p}"

    # eval mode -> identity
    out_eval = jax.block_until_ready(
        token_masking(x, seed=1234, p=p, mask_value=mask_value, training=False))
    assert bool(jnp.all(out_eval == x))

    # medium shape exercising the multi-block (tiled, pipelined) path
    B2, S2 = 1024, 512
    x2 = jax.random.randint(jax.random.PRNGKey(1), (B2, S2),
                            minval=1, maxval=30000, dtype=jnp.int32)
    out2 = jax.block_until_ready(
        token_masking(x2, seed=7, p=p, mask_value=mask_value, training=True))
    assert bool(jnp.all((out2 == x2) | (out2 == mask_value)))
    kept2 = float(jnp.mean((out2 == x2).astype(jnp.float32)))
    assert 0.05 < kept2 < 0.2, f"kept fraction {kept2} not near p={p}"

    print("KERNEL_OK")
</pallas_src>

<mosaic_0001>
module attributes {stable_mosaic.version = 11 : i64} {
  func.func @_token_masking_kernel(%arg0: i32, %arg1: memref<1xi32, #tpu.memory_space<smem>>, %arg2: memref<8x128xi32, #tpu.memory_space<vmem>>, %arg3: memref<8x128xi32, #tpu.memory_space<vmem>>) attributes {dimension_semantics = [#tpu.dimension_semantics<parallel>], iteration_bounds = array<i64: 1>, scalar_prefetch = 1 : i64, scratch_operands = 0 : i64, tpu.core_type = #tpu.core_type<tc>, window_params = [{transform_indices = @transform_0, window_bounds = array<i64: 8, 128>}, {transform_indices = @transform_1, window_bounds = array<i64: 8, 128>}]} {
    %c8_i32 = arith.constant 8 : i32
    %0 = arith.muli %arg0, %c8_i32 : i32
    %1 = tpu.iota {dimensions = array<i32: 0>} : vector<8x128xi32>
    %2 = vector.broadcast %0 : i32 to vector<8x128xi32>
    %3 = arith.addi %1, %2 : vector<8x128xi32>
    %4 = tpu.iota {dimensions = array<i32: 1>} : vector<8x128xi32>
    %c128_i32 = arith.constant 128 : i32
    %5 = vector.broadcast %c128_i32 : i32 to vector<8x128xi32>
    %6 = arith.muli %3, %5 : vector<8x128xi32>
    %7 = arith.addi %6, %4 : vector<8x128xi32>
    %c0 = arith.constant 0 : index
    %8 = memref.load %arg1[%c0] : memref<1xi32, #tpu.memory_space<smem>>
    %c-1640531527_i32 = arith.constant -1640531527 : i32
    %9 = arith.muli %8, %c-1640531527_i32 : i32
    %10 = vector.broadcast %9 : i32 to vector<8x128xi32>
    %11 = arith.xori %7, %10 : vector<8x128xi32>
    %c17_i32 = arith.constant 17 : i32
    %12 = vector.broadcast %c17_i32 : i32 to vector<8x128xi32>
    %13 = arith.shrsi %11, %12 : vector<8x128xi32>
    %c32767_i32 = arith.constant 32767 : i32
    %14 = vector.broadcast %c32767_i32 : i32 to vector<8x128xi32>
    %15 = arith.andi %13, %14 : vector<8x128xi32>
    %16 = arith.xori %11, %15 : vector<8x128xi32>
    %c-312656709_i32 = arith.constant -312656709 : i32
    %17 = vector.broadcast %c-312656709_i32 : i32 to vector<8x128xi32>
    %18 = arith.muli %16, %17 : vector<8x128xi32>
    %c11_i32 = arith.constant 11 : i32
    %19 = vector.broadcast %c11_i32 : i32 to vector<8x128xi32>
    %20 = arith.shrsi %18, %19 : vector<8x128xi32>
    %c2097151_i32 = arith.constant 2097151 : i32
    %21 = vector.broadcast %c2097151_i32 : i32 to vector<8x128xi32>
    %22 = arith.andi %20, %21 : vector<8x128xi32>
    %23 = arith.xori %18, %22 : vector<8x128xi32>
    %c-1403970735_i32 = arith.constant -1403970735 : i32
    %24 = vector.broadcast %c-1403970735_i32 : i32 to vector<8x128xi32>
    %25 = arith.muli %23, %24 : vector<8x128xi32>
    %c15_i32 = arith.constant 15 : i32
    %26 = vector.broadcast %c15_i32 : i32 to vector<8x128xi32>
    %27 = arith.shrsi %25, %26 : vector<8x128xi32>
    %c131071_i32 = arith.constant 131071 : i32
    %28 = vector.broadcast %c131071_i32 : i32 to vector<8x128xi32>
    %29 = arith.andi %27, %28 : vector<8x128xi32>
    %30 = arith.xori %25, %29 : vector<8x128xi32>
    %c830864299_i32 = arith.constant 830864299 : i32
    %31 = vector.broadcast %c830864299_i32 : i32 to vector<8x128xi32>
    %32 = arith.muli %30, %31 : vector<8x128xi32>
    %c14_i32 = arith.constant 14 : i32
    %33 = vector.broadcast %c14_i32 : i32 to vector<8x128xi32>
    %34 = arith.shrsi %32, %33 : vector<8x128xi32>
    %c262143_i32 = arith.constant 262143 : i32
    %35 = vector.broadcast %c262143_i32 : i32 to vector<8x128xi32>
    %36 = arith.andi %34, %35 : vector<8x128xi32>
    %37 = arith.xori %32, %36 : vector<8x128xi32>
    %c-1717986919_i32 = arith.constant -1717986919 : i32
    %38 = vector.broadcast %c-1717986919_i32 : i32 to vector<8x128xi32>
    %39 = arith.cmpi slt, %37, %38 : vector<8x128xi32>
    %c0_0 = arith.constant 0 : index
    %c0_1 = arith.constant 0 : index
    %40 = vector.load %arg2[%c0_0, %c0_1] : memref<8x128xi32, #tpu.memory_space<vmem>>, vector<8x128xi32>
    %c0_i32 = arith.constant 0 : i32
    %41 = vector.broadcast %c0_i32 : i32 to vector<8x128xi32>
    %42 = arith.select %39, %40, %41 : vector<8x128xi1>, vector<8x128xi32>
    %c0_2 = arith.constant 0 : index
    %c0_3 = arith.constant 0 : index
    %43 = vector.load %arg3[%c0_2, %c0_3] : memref<8x128xi32, #tpu.memory_space<vmem>>, vector<8x128xi32>
    tpu.vector_store %arg3[%c0_2, %c0_3], %42 {strides = array<i32>} : memref<8x128xi32, #tpu.memory_space<vmem>>, vector<8x128xi32>,
    return
  }
  func.func @transform_0(%arg0: i32, %arg1: memref<1xi32, #tpu.memory_space<smem>>) -> (i32, i32) {
    %c0_i32 = arith.constant 0 : i32
    %c0_i32_0 = arith.constant 0 : i32
    return %arg0, %c0_i32 : i32, i32
  }
  func.func @transform_1(%arg0: i32, %arg1: memref<1xi32, #tpu.memory_space<smem>>) -> (i32, i32) {
    %c0_i32 = arith.constant 0 : i32
    %c0_i32_0 = arith.constant 0 : i32
    return %arg0, %c0_i32 : i32, i32
  }
}

</mosaic_0001>

<llo_original>
// kernel: tpu_custom_call.1
$region0: #{tpu_custom_call.1}
  #allocation0 [shape = 'u32[]', space=smem, size = 0x4, offset = 0x4, fixed_abs, tag = 'smem constant byte address 0x4 - core index']
  #allocation1 [shape = 'u32[144,128]{1,0:T(1,128)}', space=vmem, size = 0x12000, scoped, tag = 'internal scratch']
  #allocation2 [shape = 's32[1]{0}', space=sflag, size = 0x4, scoped, tag = 'scoped memory for tpu_custom_call.1']
  #allocation3 [shape = 's32[1]{0:T(128)S(6)}', space=smem, size = 0x200, scoped, tag = 'prefetched SMEM operand 0']
  %s0 = inlined_call_operand.<no memory space> [shape: s32[1], index: 0, kind: input, shape index: {}]
  %s1 = inlined_call_operand.hbm [shape: s32[8,128], index: 1, kind: input, shape index: {}]
  %s2 = inlined_call_operand.hbm [shape: s32[8,128], index: 2, kind: output, shape index: {}]
  %s3 = sld [smem:[#allocation0]]
  $region18: #{tpu_custom_call.1} parent=0
    _
  %s5 = ssub.s32 1, %s3
  %s6 = scalar_select 0, %s5, %s3
  %7 = sst [smem:[#allocation3]] %s0
  $region1: #{tpu_custom_call.1} parent=0
    #allocation4 [shape = 'u8[4096]{0}', space=vmem, size = 0x1000, scoped, tag = 'input window, operand 1, single buffered']
    #allocation5 [shape = 's32[1]{0}', space=sflag, size = 0x4, scoped, tag = 'scoped memory for tpu_custom_call.1']
    #allocation6 [shape = 's32[1]{0}', space=sflag, size = 0x4, scoped, tag = 'scoped memory for tpu_custom_call.1']
    #allocation7 [shape = 'u8[4096]{0}', space=vmem, size = 0x1000, scoped, tag = 'output window, operand 0, single buffered']
    %8 = vsyncpa [#allocation5], 0
    %9 = vsyncpa [#allocation6], 0
    // Predicated region
    $region2: #{tpu_custom_call.1} parent=1 // pred_check
      _
    $region3: #{tpu_custom_call.1} parent=1 // pred_check_branch
      %11 = sbr.rel (0) target = $region5
    $region4: #{tpu_custom_call.1} parent=1 // pred_region
      %s13 = ssub.s32 128, 128
      %14 = vsyncadd [#allocation5], %s13
      %s16 = sshll.u32 [#allocation4], 4
      %s17 = int_to_ptr.vmem [resolvable:$true] %s16
      %19 = dma.hbm_to_vmem [thread:$0]  %s1, 128, %s17, [#allocation5]
    $region5: #{tpu_custom_call.1} parent=1 // pred_fallthru
      _
    // Predicated region
    $region6: #{tpu_custom_call.1} parent=1 // pred_check
      _
    $region7: #{tpu_custom_call.1} parent=1 // pred_check_branch
      %21 = sbr.rel (0) target = $region9
    $region8: #{tpu_custom_call.1} parent=1 // pred_region
      %22 = dma.done [#allocation5], 128
    $region9: #{tpu_custom_call.1} parent=1 // pred_fallthru
      _
    %s23 = smul.u32 0, 8
    %v24 = vlaneseq
    %v25 = vshrl.u32 %v24, 7
    %v26 = vstv %s23
    %v27 = vadd.s32 %v25, %v26
    %v28 = vlaneseq
    %v29 = vand.u32 %v28, 127
    %v30 = vmul.u32 %v27, 128
    %v31 = vadd.s32 %v30, %v29
    %s32 = sld [smem:[#allocation3]]
    %s33 = smul.u32 %s32, 2654435769
    %v34 = vstv %s33
    %v35 = vxor.u32 %v31, %v34
    %v36 = vshra.s32 %v35, 17
    %v37 = vand.u32 %v36, 32767
    %v38 = vxor.u32 %v35, %v37
    %v39 = vmul.u32 %v38, 3982310587
    %v40 = vshra.s32 %v39, 11
    %v41 = vand.u32 %v40, 2097151
    %v42 = vxor.u32 %v39, %v41
    %v43 = vmul.u32 %v42, 2890996561
    %v44 = vshra.s32 %v43, 15
    %v45 = vand.u32 %v44, 131071
    %v46 = vxor.u32 %v43, %v45
    %v47 = vmul.u32 %v46, 830864299
    %v48 = vshra.s32 %v47, 14
    %v49 = vand.u32 %v48, 262143
    %v50 = vxor.u32 %v47, %v49
    %vm51 = vcmp.lt.s32.totalorder %v50, 2576980377
    %v52 = vld [vmem:[#allocation4] sm:$0xff]
    %v53 = vsel %vm51, %v52, 0
    %54 = vst [vmem:[#allocation7] sm:$0xff] %v53
    // Predicated region
    $region10: #{tpu_custom_call.1} parent=1 // pred_check
      _
    $region11: #{tpu_custom_call.1} parent=1 // pred_check_branch
      %56 = sbr.rel (0) target = $region13
    $region12: #{tpu_custom_call.1} parent=1 // pred_region
      %s58 = ssub.s32 128, 128
      %59 = vsyncadd [#allocation6], %s58
      %s61 = sshll.u32 [#allocation7], 4
      %s62 = int_to_ptr.vmem [resolvable:$true] %s61
      %64 = dma.vmem_to_hbm [thread:$0]  %s62, 128, %s2, [#allocation6]
    $region13: #{tpu_custom_call.1} parent=1 // pred_fallthru
      _
    // Predicated region
    $region14: #{tpu_custom_call.1} parent=1 // pred_check
      _
    $region15: #{tpu_custom_call.1} parent=1 // pred_check_branch
      %66 = sbr.rel (0) target = $region17
    $region16: #{tpu_custom_call.1} parent=1 // pred_region
      %67 = dma.done [#allocation6], 128
    $region17: #{tpu_custom_call.1} parent=1 // pred_fallthru
      _
    %68 = vsyncpa [#allocation5], 1
    %69 = vsyncpa [#allocation6], 1

</llo_original>
